<compile_context>
chip_gen: v7x
topology: tpu7x:2x2x1
jax: 0.10.0
libtpu: 0.0.40
codegen_flags: <defaults>
</compile_context>

<pallas_src>
import jax
import jax.numpy as jnp
from jax import lax
from jax.experimental import pallas as pl
from jax.experimental.pallas import tpu as pltpu


# ----------------------------- helpers ------------------------------------- #

def _round_up(x, m):
    return ((x + m - 1) // m) * m


def _pad2d(a, rows, cols):
    pr, pc = rows - a.shape[0], cols - a.shape[1]
    if pr == 0 and pc == 0:
        return a
    return jnp.pad(a, ((0, pr), (0, pc)))


def _choose_tiles(n, v, h):
    # H: lane-dense padding to a multiple of 128 (even for small h); cap tk at 512.
    if h <= 512:
        hp = _round_up(h, 128)
        tk = hp
    else:
        hp = _round_up(h, 512)
        tk = 512
    # V: pad to a multiple of 256 so tn=256/512 always divides (wide, unmasked stores).
    vp = _round_up(v, 256)
    tn = 512 if vp % 512 == 0 else 256
    # Token rows: multiple of 16 (bf16 sublane packing), cap at 256.
    tm = min(256, _round_up(n, 16))
    np_ = _round_up(n, tm)
    return np_, vp, hp, tm, tn, tk


# ----------------------------- kernels ------------------------------------- #

def _gather_rows_kernel(y_sref, e_ref, out_ref):
    # Pure DMA-driven row gather: the scalar-prefetched index_map already
    # selected row E[y[i]]; just copy it to output row i.
    del y_sref
    out_ref[...] = e_ref[...]


def _fused_matmul_kernel(x_ref, w_ref, b_ref, ey_ref, we_ref, be_ref,
                         out1_ref, out2_ref):
    # out1 tile: X   @ W^T    (+ b            on last K step)
    # out2 tile: E_y @ W_e^T  (+ b_e and ReLU on last K step)
    # Both accumulate directly into their f32 output blocks, which stay
    # VMEM-resident across the K (reduction) grid axis.
    k = pl.program_id(2)
    nk = pl.num_programs(2)

    @pl.when(k == 0)
    def _init():
        out1_ref[...] = jnp.zeros_like(out1_ref)
        out2_ref[...] = jnp.zeros_like(out2_ref)

    out1_ref[...] += lax.dot_general(
        x_ref[...], w_ref[...],
        dimension_numbers=(((1,), (1,)), ((), ())),
        preferred_element_type=jnp.float32)
    out2_ref[...] += lax.dot_general(
        ey_ref[...], we_ref[...],
        dimension_numbers=(((1,), (1,)), ((), ())),
        preferred_element_type=jnp.float32)

    @pl.when(k == nk - 1)
    def _finalize():
        out1_ref[...] = out1_ref[...] + b_ref[...]
        out2_ref[...] = jnp.maximum(out2_ref[...] + be_ref[...], 0.0)


# ----------------------------- wrapper -------------------------------------- #

def label_embedding_compress_forward(params, outputs, y,
                                     matmul_dtype=jnp.bfloat16):
    """
    outputs: [B, S, H] float32
    y:       [B, S]    int32
    returns (logits [B, S, V], emb_logits [B, S, V])  (both float32)
    """
    b, s, h = outputs.shape
    v = params["linear_w"].shape[0]
    n = b * s

    np_, vp, hp, tm, tn, tk = _choose_tiles(n, v, h)

    # .detach() -> stop_gradient (forward-pass no-op).
    x = lax.stop_gradient(outputs).reshape(n, h)
    y_flat = y.reshape(n).astype(jnp.int32)

    # Zero-pad to tile multiples (numerically a no-op for the matmuls).
    # Matmul operands cast to matmul_dtype (bf16 default; f32 = exact parity);
    # biases / accumulators / outputs stay f32.
    x_p = _pad2d(x, np_, hp).astype(matmul_dtype)
    w_p = _pad2d(params["linear_w"], vp, hp).astype(matmul_dtype)
    b_p = jnp.pad(params["linear_b"].astype(jnp.float32), (0, vp - v)).reshape(1, vp)
    e_p = _pad2d(params["embedding"], vp, hp).astype(matmul_dtype)
    we_p = _pad2d(params["emb_linear_w"], vp, hp).astype(matmul_dtype)
    be_p = jnp.pad(params["emb_linear_b"].astype(jnp.float32), (0, vp - v)).reshape(1, vp)
    # Padded y entries are 0 and valid y < v <= vp, so every gathered row index
    # is in range; padded gathers fetch row 0 and are sliced off at the end.
    y_p = jnp.pad(y_flat, (0, np_ - n))

    # ---- Kernel 1: scalar-prefetch-driven row gather  E_y[i] = E[y[i]] ------ #
    # E viewed as [Vp, 1, Hp] so each block is a full (1, Hp) row window
    # (last two block dims equal the full array dims -> layout-friendly DMA).
    e_3d = e_p.reshape(vp, 1, hp)
    ey_3d = pl.pallas_call(
        _gather_rows_kernel,
        out_shape=jax.ShapeDtypeStruct((np_, 1, hp), matmul_dtype),
        grid_spec=pltpu.PrefetchScalarGridSpec(
            num_scalar_prefetch=1,                               # y -> SMEM
            grid=(np_,),
            in_specs=[pl.BlockSpec((1, 1, hp), lambda i, yref: (yref[i], 0, 0))],
            out_specs=pl.BlockSpec((1, 1, hp), lambda i, yref: (i, 0, 0))),
        compiler_params=pltpu.CompilerParams(
            dimension_semantics=("parallel",)),
    )(y_p, e_3d)
    ey_p = ey_3d.reshape(np_, hp)

    # ---- Kernel 2: fused MXU matmuls for both branches ---------------------- #
    grid = (np_ // tm, vp // tn, hp // tk)
    itemsize = jnp.dtype(matmul_dtype).itemsize
    flops = 2 * 2 * np_ * vp * hp                      # two M*N*K matmuls
    bytes_accessed = ((x_p.size + ey_p.size + w_p.size + we_p.size) * itemsize
                      + (b_p.size + be_p.size) * 4
                      + 2 * np_ * vp * 4)

    out1_p, out2_p = pl.pallas_call(
        _fused_matmul_kernel,
        out_shape=(jax.ShapeDtypeStruct((np_, vp), jnp.float32),
                   jax.ShapeDtypeStruct((np_, vp), jnp.float32)),
        grid_spec=pltpu.PrefetchScalarGridSpec(
            num_scalar_prefetch=0,
            grid=grid,
            in_specs=[pl.BlockSpec((tm, tk), lambda i, j, k: (i, k)),    # x
                      pl.BlockSpec((tn, tk), lambda i, j, k: (j, k)),    # W
                      pl.BlockSpec((1, tn), lambda i, j, k: (0, j)),     # b
                      pl.BlockSpec((tm, tk), lambda i, j, k: (i, k)),    # E_y
                      pl.BlockSpec((tn, tk), lambda i, j, k: (j, k)),    # W_e
                      pl.BlockSpec((1, tn), lambda i, j, k: (0, j))],    # b_e
            out_specs=(pl.BlockSpec((tm, tn), lambda i, j, k: (i, j)),
                       pl.BlockSpec((tm, tn), lambda i, j, k: (i, j)))),
        compiler_params=pltpu.CompilerParams(
            dimension_semantics=("parallel", "parallel", "arbitrary"),
            vmem_limit_bytes=48 * 1024 * 1024),
        cost_estimate=pl.CostEstimate(flops=flops, transcendentals=0,
                                      bytes_accessed=bytes_accessed),
    )(x_p, w_p, b_p, ey_p, we_p, be_p)

    out1 = out1_p[:n, :v].reshape(b, s, v)
    out2 = out2_p[:n, :v].reshape(b, s, v)
    return out1, out2


# ----------------------------- main ----------------------------------------- #

if __name__ == "__main__":
    hidden_size = 32
    vocab_size = 64
    batch, seq = 2, 8

    key = jax.random.PRNGKey(0)
    k_out, k_y, k_lw, k_lb, k_emb, k_ew, k_eb = jax.random.split(key, 7)

    params = {
        "linear_w": jax.random.normal(k_lw, (vocab_size, hidden_size),
                                      jnp.float32) * 0.1,
        "linear_b": jax.random.normal(k_lb, (vocab_size,), jnp.float32) * 0.1,
        "embedding": jax.random.normal(k_emb, (vocab_size, hidden_size),
                                       jnp.float32),
        "emb_linear_w": jax.random.normal(k_ew, (vocab_size, hidden_size),
                                          jnp.float32) * 0.1,
        "emb_linear_b": jax.random.normal(k_eb, (vocab_size,),
                                          jnp.float32) * 0.1,
    }

    outputs = jax.random.normal(k_out, (batch, seq, hidden_size), jnp.float32)
    y = jax.random.randint(k_y, (batch, seq), 0, vocab_size, jnp.int32)

    fwd = jax.jit(label_embedding_compress_forward)
    out1, out2 = fwd(params, outputs, y)
    jax.block_until_ready((out1, out2))

    # Reference (plain f32 JAX).  bf16 MXU operands -> slightly loosened tolerance.
    ref1 = outputs.reshape(-1, hidden_size) @ params["linear_w"].T + params["linear_b"]
    ref1 = ref1.reshape(batch, seq, vocab_size)
    emb = params["embedding"][y.reshape(-1)]
    ref2 = jnp.maximum(emb @ params["emb_linear_w"].T + params["emb_linear_b"], 0.0)
    ref2 = ref2.reshape(batch, seq, vocab_size)
    assert jnp.allclose(out1, ref1, atol=2e-2, rtol=2e-2), "linear branch mismatch"
    assert jnp.allclose(out2, ref2, atol=2e-2, rtol=2e-2), "embedding branch mismatch"

    print("KERNEL_OK")
</pallas_src>

<mosaic_0001>
module attributes {stable_mosaic.version = 11 : i64} {
  func.func @_gather_rows_kernel(%arg0: i32, %arg1: memref<16xi32, #tpu.memory_space<smem>>, %arg2: memref<1x1x128xbf16, #tpu.memory_space<vmem>>, %arg3: memref<1x1x128xbf16, #tpu.memory_space<vmem>>) attributes {dimension_semantics = [#tpu.dimension_semantics<parallel>], iteration_bounds = array<i64: 16>, scalar_prefetch = 1 : i64, scratch_operands = 0 : i64, tpu.core_type = #tpu.core_type<tc>, window_params = [{transform_indices = @transform_0, window_bounds = array<i64: 1, 1, 128>}, {transform_indices = @transform_1, window_bounds = array<i64: 1, 1, 128>}]} {
    %c0 = arith.constant 0 : index
    %c0_0 = arith.constant 0 : index
    %c0_1 = arith.constant 0 : index
    %0 = vector.load %arg2[%c0, %c0_0, %c0_1] : memref<1x1x128xbf16, #tpu.memory_space<vmem>>, vector<1x1x128xbf16>
    %c0_2 = arith.constant 0 : index
    %c0_3 = arith.constant 0 : index
    %c0_4 = arith.constant 0 : index
    %1 = vector.load %arg3[%c0_2, %c0_3, %c0_4] : memref<1x1x128xbf16, #tpu.memory_space<vmem>>, vector<1x1x128xbf16>
    tpu.vector_store %arg3[%c0_2, %c0_3, %c0_4], %0 {strides = array<i32>} : memref<1x1x128xbf16, #tpu.memory_space<vmem>>, vector<1x1x128xbf16>,
    return
  }
  func.func @transform_0(%arg0: i32, %arg1: memref<16xi32, #tpu.memory_space<smem>>) -> (i32, i32, i32) {
    %0 = arith.index_cast %arg0 : i32 to index
    %1 = memref.load %arg1[%0] : memref<16xi32, #tpu.memory_space<smem>>
    %c0_i32 = arith.constant 0 : i32
    %c0_i32_0 = arith.constant 0 : i32
    %c0_i32_1 = arith.constant 0 : i32
    return %1, %c0_i32, %c0_i32_0 : i32, i32, i32
  }
  func.func @transform_1(%arg0: i32, %arg1: memref<16xi32, #tpu.memory_space<smem>>) -> (i32, i32, i32) {
    %c0_i32 = arith.constant 0 : i32
    %c0_i32_0 = arith.constant 0 : i32
    %c0_i32_1 = arith.constant 0 : i32
    return %arg0, %c0_i32, %c0_i32_0 : i32, i32, i32
  }
}

module attributes {stable_mosaic.version = 11 : i64} {
  func.func @_fused_matmul_kernel(%arg0: i32, %arg1: i32, %arg2: i32, %arg3: memref<16x128xbf16, #tpu.memory_space<vmem>>, %arg4: memref<256x128xbf16, #tpu.memory_space<vmem>>, %arg5: memref<1x256xf32, #tpu.memory_space<vmem>>, %arg6: memref<16x128xbf16, #tpu.memory_space<vmem>>, %arg7: memref<256x128xbf16, #tpu.memory_space<vmem>>, %arg8: memref<1x256xf32, #tpu.memory_space<vmem>>, %arg9: memref<16x256xf32, #tpu.memory_space<vmem>>, %arg10: memref<16x256xf32, #tpu.memory_space<vmem>>) attributes {dimension_semantics = [#tpu.dimension_semantics<parallel>, #tpu.dimension_semantics<parallel>, #tpu.dimension_semantics<arbitrary>], iteration_bounds = array<i64: 1, 1, 1>, scalar_prefetch = 0 : i64, scratch_operands = 0 : i64, tpu.core_type = #tpu.core_type<tc>, window_params = [{transform_indices = @transform_0, window_bounds = array<i64: 16, 128>}, {transform_indices = @transform_1, window_bounds = array<i64: 256, 128>}, {transform_indices = @transform_2, window_bounds = array<i64: 1, 256>}, {transform_indices = @transform_3, window_bounds = array<i64: 16, 128>}, {transform_indices = @transform_4, window_bounds = array<i64: 256, 128>}, {transform_indices = @transform_5, window_bounds = array<i64: 1, 256>}, {transform_indices = @transform_6, window_bounds = array<i64: 16, 256>}, {transform_indices = @transform_7, window_bounds = array<i64: 16, 256>}]} {
    %c0_i32 = arith.constant 0 : i32
    %0 = arith.cmpi eq, %arg2, %c0_i32 : i32
    %1 = arith.extui %0 : i1 to i32
    %c0_i32_0 = arith.constant 0 : i32
    %2 = arith.cmpi ne, %1, %c0_i32_0 : i32
    scf.if %2 {
      %cst_19 = arith.constant 0.000000e+00 : f32
      %18 = vector.broadcast %cst_19 : f32 to vector<16x256xf32>
      %c0_20 = arith.constant 0 : index
      %c0_21 = arith.constant 0 : index
      %19 = vector.load %arg9[%c0_20, %c0_21] : memref<16x256xf32, #tpu.memory_space<vmem>>, vector<16x256xf32>
      tpu.vector_store %arg9[%c0_20, %c0_21], %18 {strides = array<i32>} : memref<16x256xf32, #tpu.memory_space<vmem>>, vector<16x256xf32>,
      %cst_22 = arith.constant 0.000000e+00 : f32
      %20 = vector.broadcast %cst_22 : f32 to vector<16x256xf32>
      %c0_23 = arith.constant 0 : index
      %c0_24 = arith.constant 0 : index
      %21 = vector.load %arg10[%c0_23, %c0_24] : memref<16x256xf32, #tpu.memory_space<vmem>>, vector<16x256xf32>
      tpu.vector_store %arg10[%c0_23, %c0_24], %20 {strides = array<i32>} : memref<16x256xf32, #tpu.memory_space<vmem>>, vector<16x256xf32>,
    } else {
    }
    %c0 = arith.constant 0 : index
    %c0_1 = arith.constant 0 : index
    %3 = vector.load %arg9[%c0, %c0_1] : memref<16x256xf32, #tpu.memory_space<vmem>>, vector<16x256xf32>
    %c0_2 = arith.constant 0 : index
    %c0_3 = arith.constant 0 : index
    %4 = vector.load %arg3[%c0_2, %c0_3] : memref<16x128xbf16, #tpu.memory_space<vmem>>, vector<16x128xbf16>
    %c0_4 = arith.constant 0 : index
    %c0_5 = arith.constant 0 : index
    %5 = vector.load %arg4[%c0_4, %c0_5] : memref<256x128xbf16, #tpu.memory_space<vmem>>, vector<256x128xbf16>
    %cst = arith.constant dense<0.000000e+00> : vector<16x256xf32>
    %6 = tpu.matmul %4, %5, %cst {dimension_numbers = #tpu.dot_dimension_numbers<[1], [1], [0], [0], [0, 0, 1, 0], [], []>} : vector<16x128xbf16>, vector<256x128xbf16>, vector<16x256xf32> -> vector<16x256xf32>
    %7 = arith.addf %3, %6 : vector<16x256xf32>
    %c0_6 = arith.constant 0 : index
    %c0_7 = arith.constant 0 : index
    %8 = vector.load %arg9[%c0_6, %c0_7] : memref<16x256xf32, #tpu.memory_space<vmem>>, vector<16x256xf32>
    tpu.vector_store %arg9[%c0_6, %c0_7], %7 {strides = array<i32>} : memref<16x256xf32, #tpu.memory_space<vmem>>, vector<16x256xf32>,
    %c0_8 = arith.constant 0 : index
    %c0_9 = arith.constant 0 : index
    %9 = vector.load %arg10[%c0_8, %c0_9] : memref<16x256xf32, #tpu.memory_space<vmem>>, vector<16x256xf32>
    %c0_10 = arith.constant 0 : index
    %c0_11 = arith.constant 0 : index
    %10 = vector.load %arg6[%c0_10, %c0_11] : memref<16x128xbf16, #tpu.memory_space<vmem>>, vector<16x128xbf16>
    %c0_12 = arith.constant 0 : index
    %c0_13 = arith.constant 0 : index
    %11 = vector.load %arg7[%c0_12, %c0_13] : memref<256x128xbf16, #tpu.memory_space<vmem>>, vector<256x128xbf16>
    %cst_14 = arith.constant dense<0.000000e+00> : vector<16x256xf32>
    %12 = tpu.matmul %10, %11, %cst_14 {dimension_numbers = #tpu.dot_dimension_numbers<[1], [1], [0], [0], [0, 0, 1, 0], [], []>} : vector<16x128xbf16>, vector<256x128xbf16>, vector<16x256xf32> -> vector<16x256xf32>
    %13 = arith.addf %9, %12 : vector<16x256xf32>
    %c0_15 = arith.constant 0 : index
    %c0_16 = arith.constant 0 : index
    %14 = vector.load %arg10[%c0_15, %c0_16] : memref<16x256xf32, #tpu.memory_space<vmem>>, vector<16x256xf32>
    tpu.vector_store %arg10[%c0_15, %c0_16], %13 {strides = array<i32>} : memref<16x256xf32, #tpu.memory_space<vmem>>, vector<16x256xf32>,
    %c0_i32_17 = arith.constant 0 : i32
    %15 = arith.cmpi eq, %arg2, %c0_i32_17 : i32
    %16 = arith.extui %15 : i1 to i32
    %c0_i32_18 = arith.constant 0 : i32
    %17 = arith.cmpi ne, %16, %c0_i32_18 : i32
    scf.if %17 {
      %c0_19 = arith.constant 0 : index
      %c0_20 = arith.constant 0 : index
      %18 = vector.load %arg9[%c0_19, %c0_20] : memref<16x256xf32, #tpu.memory_space<vmem>>, vector<16x256xf32>
      %c0_21 = arith.constant 0 : index
      %c0_22 = arith.constant 0 : index
      %19 = vector.load %arg5[%c0_21, %c0_22] : memref<1x256xf32, #tpu.memory_space<vmem>>, vector<1x256xf32>
      %20 = vector.broadcast %19 : vector<1x256xf32> to vector<16x256xf32>
      %21 = arith.addf %18, %20 : vector<16x256xf32>
      %c0_23 = arith.constant 0 : index
      %c0_24 = arith.constant 0 : index
      %22 = vector.load %arg9[%c0_23, %c0_24] : memref<16x256xf32, #tpu.memory_space<vmem>>, vector<16x256xf32>
      tpu.vector_store %arg9[%c0_23, %c0_24], %21 {strides = array<i32>} : memref<16x256xf32, #tpu.memory_space<vmem>>, vector<16x256xf32>,
      %c0_25 = arith.constant 0 : index
      %c0_26 = arith.constant 0 : index
      %23 = vector.load %arg10[%c0_25, %c0_26] : memref<16x256xf32, #tpu.memory_space<vmem>>, vector<16x256xf32>
      %c0_27 = arith.constant 0 : index
      %c0_28 = arith.constant 0 : index
      %24 = vector.load %arg8[%c0_27, %c0_28] : memref<1x256xf32, #tpu.memory_space<vmem>>, vector<1x256xf32>
      %25 = vector.broadcast %24 : vector<1x256xf32> to vector<16x256xf32>
      %26 = arith.addf %23, %25 : vector<16x256xf32>
      %cst_29 = arith.constant 0.000000e+00 : f32
      %27 = vector.broadcast %cst_29 : f32 to vector<16x256xf32>
      %28 = arith.maximumf %26, %27 : vector<16x256xf32>
      %c0_30 = arith.constant 0 : index
      %c0_31 = arith.constant 0 : index
      %29 = vector.load %arg10[%c0_30, %c0_31] : memref<16x256xf32, #tpu.memory_space<vmem>>, vector<16x256xf32>
      tpu.vector_store %arg10[%c0_30, %c0_31], %28 {strides = array<i32>} : memref<16x256xf32, #tpu.memory_space<vmem>>, vector<16x256xf32>,
    } else {
    }
    return
  }
  func.func @transform_0(%arg0: i32, %arg1: i32, %arg2: i32) -> (i32, i32) {
    %c0_i32 = arith.constant 0 : i32
    return %arg0, %arg2 : i32, i32
  }
  func.func @transform_1(%arg0: i32, %arg1: i32, %arg2: i32) -> (i32, i32) {
    %c0_i32 = arith.constant 0 : i32
    return %arg1, %arg2 : i32, i32
  }
  func.func @transform_2(%arg0: i32, %arg1: i32, %arg2: i32) -> (i32, i32) {
    %c0_i32 = arith.constant 0 : i32
    %c0_i32_0 = arith.constant 0 : i32
    return %c0_i32, %arg1 : i32, i32
  }
  func.func @transform_3(%arg0: i32, %arg1: i32, %arg2: i32) -> (i32, i32) {
    %c0_i32 = arith.constant 0 : i32
    return %arg0, %arg2 : i32, i32
  }
  func.func @transform_4(%arg0: i32, %arg1: i32, %arg2: i32) -> (i32, i32) {
    %c0_i32 = arith.constant 0 : i32
    return %arg1, %arg2 : i32, i32
  }
  func.func @transform_5(%arg0: i32, %arg1: i32, %arg2: i32) -> (i32, i32) {
    %c0_i32 = arith.constant 0 : i32
    %c0_i32_0 = arith.constant 0 : i32
    return %c0_i32, %arg1 : i32, i32
  }
  func.func @transform_6(%arg0: i32, %arg1: i32, %arg2: i32) -> (i32, i32) {
    %c0_i32 = arith.constant 0 : i32
    return %arg0, %arg1 : i32, i32
  }
  func.func @transform_7(%arg0: i32, %arg1: i32, %arg2: i32) -> (i32, i32) {
    %c0_i32 = arith.constant 0 : i32
    return %arg0, %arg1 : i32, i32
  }
}

</mosaic_0001>

<llo_original>
// kernel: label_embedding_compress_forward.2
$region0: #{label_embedding_compress_forward.2}
  #allocation0 [shape = 'u32[]', space=smem, size = 0x4, offset = 0x4, fixed_abs, tag = 'smem constant byte address 0x4 - core index']
  #allocation1 [shape = 'u32[144,128]{1,0:T(1,128)}', space=vmem, size = 0x12000, scoped, tag = 'internal scratch']
  #allocation2 [shape = 's32[1]{0}', space=sflag, size = 0x4, scoped, tag = 'scoped memory for label_embedding_compress_forward.2']
  #allocation3 [shape = 'u8[512]{0}', space=smem, size = 0x200, scoped, tag = 'prefetched SMEM operand 0']
  %s0 = inlined_call_operand.vmem [shape: s32[16], index: 0, kind: input, shape index: {}]
  %s1 = inlined_call_operand.vmem [shape: bf16[256,1,128], index: 1, kind: input, shape index: {}]
  %s2 = inlined_call_operand.vmem [shape: bf16[16,1,128], index: 2, kind: output, shape index: {}]
  %s3 = sld [smem:[#allocation0]]
  $region37: #{label_embedding_compress_forward.2} parent=0
    _
  %s5 = ssub.s32 1, %s3
  %s6 = scalar_select 0, %s5, %s3
  %s7 = sshll.u32 %s0, 4
  %s8 = int_to_ptr.vmem [resolvable:$true] %s7
  %10 = dma.vmem_to_smem %s8, 16, [#allocation3], [#allocation2]
  %11 = dma.done [#allocation2], 16
  %12 = sfence
  loop: start=0, step=1, limit=18
  $region2: #{label_embedding_compress_forward.2} parent=0 // loop_pre_header
    _
  $region3: #{label_embedding_compress_forward.2} parent=0 // loop_header
    %s14 = sphi 0, %s18
    %p15 = scmp.ge.s32.totalorder %s14, 18
    %s26 = sphi 0, %s28
    %s29 = sphi 0, %s26
    %s30 = sphi 0, %s29
    %s46 = sphi 0, %s30
    %s52 = sphi 0, %s54
    %s55 = sphi 0, %s52
    %s56 = sphi 0, %s55
    %s72 = sphi 0, %s56
  $region4: #{label_embedding_compress_forward.2} parent=0 // loop_header_branch
    %17 = sbr.rel (%p15) target = $region8
  $region5: #{label_embedding_compress_forward.2} parent=0 // loop_body
    %s19 = ssub.s32 %s14, 1
    %s20 = ssub.s32 %s14, 2
    %s21 = sadd.s32 %s14, 1
    %s22 = sld [smem:[#allocation3 + %s14]]
    %s23 = sld [smem:[#allocation3 + %s21]]
    %s24 = ssub.s32 %s22, %s23
    %p25 = scmp.eq.s32.totalorder %s24, 0
    %s27 = sadd.s32 %s26, 1
    %s28 = scalar_select %p25, %s26, %s27
    %p31 = pneg %p25
    %p32 = scmp.eq.s32.totalorder %s14, 15
    %p33 = por %p31, %p32
    %p34 = scmp.ne.s32.totalorder %s26, %s29
    %p35 = scmp.eq.s32.totalorder %s14, 0
    %p36 = por %p34, %p35
    %p37 = scmp.ne.s32.totalorder %s26, %s29
    %p38 = scmp.eq.s32.totalorder %s19, 15
    %p39 = por %p37, %p38
    %p40 = scmp.ne.s32.totalorder %s29, %s30
    %p41 = scmp.eq.s32.totalorder %s19, 0
    %p42 = por %p40, %p41
    %p43 = scmp.ne.s32.totalorder %s29, %s30
    %p44 = scmp.eq.s32.totalorder %s20, 15
    %p45 = por %p43, %p44
    %p47 = scmp.ne.s32.totalorder %s30, %s46
    %p48 = scmp.eq.s32.totalorder %s20, 0
    %p49 = por %p47, %p48
    %s50 = ssub.s32 %s14, %s21
    %p51 = scmp.eq.s32.totalorder %s50, 0
    %s53 = sadd.s32 %s52, 1
    %s54 = scalar_select %p51, %s52, %s53
    %p57 = pneg %p51
    %p58 = scmp.eq.s32.totalorder %s14, 15
    %p59 = por %p57, %p58
    %p60 = scmp.ne.s32.totalorder %s52, %s55
    %p61 = scmp.eq.s32.totalorder %s14, 0
    %p62 = por %p60, %p61
    %p63 = scmp.ne.s32.totalorder %s52, %s55
    %p64 = scmp.eq.s32.totalorder %s19, 15
    %p65 = por %p63, %p64
    %p66 = scmp.ne.s32.totalorder %s55, %s56
    %p67 = scmp.eq.s32.totalorder %s19, 0
    %p68 = por %p66, %p67
    %p69 = scmp.ne.s32.totalorder %s55, %s56
    %p70 = scmp.eq.s32.totalorder %s20, 15
    %p71 = por %p69, %p70
    %p73 = scmp.ne.s32.totalorder %s56, %s72
    %p74 = scmp.eq.s32.totalorder %s20, 0
    %p75 = por %p73, %p74
    %p76 = scmp.le.s32.totalorder 1, %s14
    %p77 = scmp.lt.s32.totalorder %s14, 17
    %p78 = pnand %p76, %p77
    %p79 = pneg %p78
    // Predicated region
    $region9: #{label_embedding_compress_forward.2} parent=5 // pred_check
      _
    $region10: #{label_embedding_compress_forward.2} parent=5 // pred_check_branch
      %81 = sbr.rel (%p78) target = $region12
    $region11: #{label_embedding_compress_forward.2} parent=5 // pred_region
      %s82 = ssub.s32 %s14, 1
    $region12: #{label_embedding_compress_forward.2} parent=5 // pred_fallthru
      _
    %p83 = scmp.lt.s32.totalorder %s14, 16
    // Predicated region
    $region13: #{label_embedding_compress_forward.2} parent=5 // pred_check
      %p84 = pneg %p83
    $region14: #{label_embedding_compress_forward.2} parent=5 // pred_check_branch
      %86 = sbr.rel (%p84) target = $region16
    $region15: #{label_embedding_compress_forward.2} parent=5 // pred_region
      // Predicated region
      $region17: #{label_embedding_compress_forward.2} parent=15 // pred_check
        %p87 = pneg %p36
      $region18: #{label_embedding_compress_forward.2} parent=15 // pred_check_branch
        %89 = sbr.rel (%p87) target = $region20
      $region19: #{label_embedding_compress_forward.2} parent=15 // pred_region
        %s90 = sld [smem:[#allocation3 + %s14]]
        %p91 = scmp.lt.s32.totalorder %s90, 255
        %s92 = scalar_select %p91, %s90, 255
        %s93 = scalar_lea.vmem %s1, %s92
        %s94 = sld [smem:[#allocation3 + %s14]]
      $region20: #{label_embedding_compress_forward.2} parent=15 // pred_fallthru
        _
    $region16: #{label_embedding_compress_forward.2} parent=5 // pred_fallthru
      _
    %p95 = scmp.le.s32.totalorder 1, %s14
    %p96 = scmp.lt.s32.totalorder %s14, 17
    %p97 = pnand %p95, %p96
    %p98 = pneg %p97
    // Predicated region
    $region21: #{label_embedding_compress_forward.2} parent=5 // pred_check
      _
    $region22: #{label_embedding_compress_forward.2} parent=5 // pred_check_branch
      %100 = sbr.rel (%p97) target = $region24
    $region23: #{label_embedding_compress_forward.2} parent=5 // pred_region
      %s101 = ssub.s32 %s14, 1
      %s102 = sld [smem:[#allocation3 + %s19]]
      %p103 = scmp.lt.s32.totalorder %s102, 255
      %s104 = scalar_select %p103, %s102, 255
      %s105 = scalar_lea.vmem %s1, %s104
      %p106 = pneg %p42
      %p107 = pneg %p39
      %p108 = pneg %p68
      %p109 = pneg %p65
      %p110 = scmp.lt.s32.totalorder %s19, 15
      %s111 = scalar_select %p110, %s19, 15
      %s112 = scalar_lea.vmem %s2, %s111
      %s113 = sld [smem:[#allocation3 + %s19]]
      %p114 = scmp.lt.s32.totalorder %s113, 255
      %s115 = scalar_select %p114, %s113, 255
      %s116 = scalar_lea.vmem %s1, %s115
      %s117 = sld [smem:[#allocation3 + %s19]]
      %p118 = scmp.lt.s32.totalorder %s19, 15
      %s119 = scalar_select %p118, %s19, 15
      %s120 = scalar_lea.vmem %s2, %s119
      %v121 = vld [vmem:[%s116] sm:$0x1]
      %vm122 = vcmask 1040384
      %vm123 = vsmask.f32 256
      %vm124 = vmand %vm122, %vm123
      %v125 = vld [vmem:[%s120] sm:$0x1]
      %v126 = vsel %vm124, %v121, %v125
      %127 = vst [vmem:[%s120] sm:$0x1] %v126
      %p128 = scmp.lt.s32.totalorder %s19, 15
      %s129 = scalar_select %p128, %s19, 15
      %s130 = scalar_lea.vmem %s2, %s129
      // Predicated region
      $region25: #{label_embedding_compress_forward.2} parent=23 // pred_check
        %p131 = pneg %p65
      $region26: #{label_embedding_compress_forward.2} parent=23 // pred_check_branch
        %133 = sbr.rel (%p131) target = $region28
      $region27: #{label_embedding_compress_forward.2} parent=23 // pred_region
        _
      $region28: #{label_embedding_compress_forward.2} parent=23 // pred_fallthru
        _
    $region24: #{label_embedding_compress_forward.2} parent=5 // pred_fallthru
      _
    %p134 = scmp.le.s32.totalorder 2, %s14
    // Predicated region
    $region29: #{label_embedding_compress_forward.2} parent=5 // pred_check
      %p135 = pneg %p134
    $region30: #{label_embedding_compress_forward.2} parent=5 // pred_check_branch
      %137 = sbr.rel (%p135) target = $region32
    $region31: #{label_embedding_compress_forward.2} parent=5 // pred_region
      %s138 = ssub.s32 %s14, 2
      // Predicated region
      $region33: #{label_embedding_compress_forward.2} parent=31 // pred_check
        %p139 = pneg %p71
      $region34: #{label_embedding_compress_forward.2} parent=31 // pred_check_branch
        %141 = sbr.rel (%p139) target = $region36
      $region35: #{label_embedding_compress_forward.2} parent=31 // pred_region
        %p142 = scmp.lt.s32.totalorder %s20, 15
        %s143 = scalar_select %p142, %s20, 15
        %s144 = scalar_lea.vmem %s2, %s143
      $region36: #{label_embedding_compress_forward.2} parent=31 // pred_fallthru
        _
    $region32: #{label_embedding_compress_forward.2} parent=5 // pred_fallthru
      _
  $region6: #{label_embedding_compress_forward.2} parent=0 // loop_footer
    %s18 = sadd.s32 1, %s14
  $region7: #{label_embedding_compress_forward.2} parent=0 // loop_footer_branch
    %13 = sbr.rel target = $region3
  $region8: #{label_embedding_compress_forward.2} parent=0 // loop_exit
    _

// kernel: label_embedding_compress_forward.3
$region0: #{label_embedding_compress_forward.3}
  #allocation0 [shape = 'u32[]', space=smem, size = 0x4, offset = 0x4, fixed_abs, tag = 'smem constant byte address 0x4 - core index']
  #allocation1 [shape = 'u32[144,128]{1,0:T(1,128)}', space=vmem, size = 0x12000, scoped, tag = 'internal scratch']
  %s0 = inlined_call_operand.vmem [shape: bf16[16,128], index: 0, kind: input, shape index: {}]
  %s1 = inlined_call_operand.vmem [shape: bf16[256,128], index: 1, kind: input, shape index: {}]
  %s2 = inlined_call_operand.vmem [shape: f32[1,256], index: 2, kind: input, shape index: {}]
  %s3 = inlined_call_operand.vmem [shape: bf16[16,128], index: 3, kind: input, shape index: {}]
  %s4 = inlined_call_operand.vmem [shape: bf16[256,128], index: 4, kind: input, shape index: {}]
  %s5 = inlined_call_operand.vmem [shape: f32[1,256], index: 5, kind: input, shape index: {}]
  %s6 = inlined_call_operand.vmem [shape: f32[16,256], index: 6, kind: output, shape index: {0}]
  %s7 = inlined_call_operand.vmem [shape: f32[16,256], index: 7, kind: output, shape index: {1}]
  %8 = xla_tuple %s6, %s7
  %s9 = sld [smem:[#allocation0]]
  $region50: #{label_embedding_compress_forward.3} parent=0
    _
  %s11 = ssub.s32 1, %s9
  %s12 = scalar_select 0, %s11, %s9
  // Predicated region
  $region2: #{label_embedding_compress_forward.3} parent=0 // pred_check
    _
  $region3: #{label_embedding_compress_forward.3} parent=0 // pred_check_branch
    %14 = sbr.rel (0) target = $region5
  $region4: #{label_embedding_compress_forward.3} parent=0 // pred_region
    _
  $region5: #{label_embedding_compress_forward.3} parent=0 // pred_fallthru
    _
  // Predicated region
  $region6: #{label_embedding_compress_forward.3} parent=0 // pred_check
    _
  $region7: #{label_embedding_compress_forward.3} parent=0 // pred_check_branch
    %16 = sbr.rel (0) target = $region9
  $region8: #{label_embedding_compress_forward.3} parent=0 // pred_region
    _
  $region9: #{label_embedding_compress_forward.3} parent=0 // pred_fallthru
    _
  // Predicated region
  $region10: #{label_embedding_compress_forward.3} parent=0 // pred_check
    _
  $region11: #{label_embedding_compress_forward.3} parent=0 // pred_check_branch
    %18 = sbr.rel (0) target = $region13
  $region12: #{label_embedding_compress_forward.3} parent=0 // pred_region
    _
  $region13: #{label_embedding_compress_forward.3} parent=0 // pred_fallthru
    _
  // Predicated region
  $region14: #{label_embedding_compress_forward.3} parent=0 // pred_check
    _
  $region15: #{label_embedding_compress_forward.3} parent=0 // pred_check_branch
    %20 = sbr.rel (0) target = $region17
  $region16: #{label_embedding_compress_forward.3} parent=0 // pred_region
    _
  $region17: #{label_embedding_compress_forward.3} parent=0 // pred_fallthru
    _
  // Predicated region
  $region18: #{label_embedding_compress_forward.3} parent=0 // pred_check
    _
  $region19: #{label_embedding_compress_forward.3} parent=0 // pred_check_branch
    %22 = sbr.rel (0) target = $region21
  $region20: #{label_embedding_compress_forward.3} parent=0 // pred_region
    _
  $region21: #{label_embedding_compress_forward.3} parent=0 // pred_fallthru
    _
  // Predicated region
  $region22: #{label_embedding_compress_forward.3} parent=0 // pred_check
    _
  $region23: #{label_embedding_compress_forward.3} parent=0 // pred_check_branch
    %24 = sbr.rel (0) target = $region25
  $region24: #{label_embedding_compress_forward.3} parent=0 // pred_region
    _
  $region25: #{label_embedding_compress_forward.3} parent=0 // pred_fallthru
    _
  %p26 = scmp.eq.s32.totalorder 0, 0
  // Predicated region
  $region26: #{label_embedding_compress_forward.3} parent=0 // pred_check
    %p27 = pneg %p26
  $region27: #{label_embedding_compress_forward.3} parent=0 // pred_check_branch
    %29 = sbr.rel (%p27) target = $region29
  $region28: #{label_embedding_compress_forward.3} parent=0 // pred_region
    %30 = vst [vmem:[%s6] sm:$0xff] 0.0
    %31 = vst [vmem:[%s6 + $0x8] sm:$0xff] 0.0
    %32 = vst [vmem:[%s6 + $0x10] sm:$0xff] 0.0
    %33 = vst [vmem:[%s6 + $0x18] sm:$0xff] 0.0
    %34 = vst [vmem:[%s7] sm:$0xff] 0.0
    %35 = vst [vmem:[%s7 + $0x8] sm:$0xff] 0.0
    %36 = vst [vmem:[%s7 + $0x10] sm:$0xff] 0.0
    %37 = vst [vmem:[%s7 + $0x18] sm:$0xff] 0.0
  $region29: #{label_embedding_compress_forward.3} parent=0 // pred_fallthru
    _
  %v38 = vld [vmem:[%s6] sm:$0xff]
  %v39 = vld [vmem:[%s6 + $0x8] sm:$0xff]
  %v40 = vld [vmem:[%s6 + $0x10] sm:$0xff]
  %v41 = vld [vmem:[%s6 + $0x18] sm:$0xff]
  %v42 = vld [vmem:[%s0] sm:$0xf]
  %v43 = vld [vmem:[%s0 + $0x4] sm:$0xf]
  %v44 = vld [vmem:[%s1] sm:$0xf]
  %v45 = vld [vmem:[%s1 + $0x4] sm:$0xf]
  %v46 = vld [vmem:[%s1 + $0x8] sm:$0xf]
  %v47 = vld [vmem:[%s1 + $0xc] sm:$0xf]
  %v48 = vld [vmem:[%s1 + $0x10] sm:$0xf]
  %v49 = vld [vmem:[%s1 + $0x14] sm:$0xf]
  %v50 = vld [vmem:[%s1 + $0x18] sm:$0xf]
  %v51 = vld [vmem:[%s1 + $0x1c] sm:$0xf]
  %v52 = vld [vmem:[%s1 + $0x20] sm:$0xf]
  %v53 = vld [vmem:[%s1 + $0x24] sm:$0xf]
  %v54 = vld [vmem:[%s1 + $0x28] sm:$0xf]
  %v55 = vld [vmem:[%s1 + $0x2c] sm:$0xf]
  %v56 = vld [vmem:[%s1 + $0x30] sm:$0xf]
  %v57 = vld [vmem:[%s1 + $0x34] sm:$0xf]
  %v58 = vld [vmem:[%s1 + $0x38] sm:$0xf]
  %v59 = vld [vmem:[%s1 + $0x3c] sm:$0xf]
  %v60 = vld [vmem:[%s1 + $0x40] sm:$0xf]
  %v61 = vld [vmem:[%s1 + $0x44] sm:$0xf]
  %v62 = vld [vmem:[%s1 + $0x48] sm:$0xf]
  %v63 = vld [vmem:[%s1 + $0x4c] sm:$0xf]
  %v64 = vld [vmem:[%s1 + $0x50] sm:$0xf]
  %v65 = vld [vmem:[%s1 + $0x54] sm:$0xf]
  %v66 = vld [vmem:[%s1 + $0x58] sm:$0xf]
  %v67 = vld [vmem:[%s1 + $0x5c] sm:$0xf]
  %v68 = vld [vmem:[%s1 + $0x60] sm:$0xf]
  %v69 = vld [vmem:[%s1 + $0x64] sm:$0xf]
  %v70 = vld [vmem:[%s1 + $0x68] sm:$0xf]
  %v71 = vld [vmem:[%s1 + $0x6c] sm:$0xf]
  %v72 = vld [vmem:[%s1 + $0x70] sm:$0xf]
  %v73 = vld [vmem:[%s1 + $0x74] sm:$0xf]
  %v74 = vld [vmem:[%s1 + $0x78] sm:$0xf]
  %v75 = vld [vmem:[%s1 + $0x7c] sm:$0xf]
  %v78 = vunpack.c.l.b16 %v42
  %v79 = vunpack.c.l.b16 %v43
  %v80 = vpack.c.b16 %v79, %v78
  %v114 = vunpack.c.l.b16 %v44
  %v115 = vunpack.c.l.b16 %v45
  %v116 = vunpack.c.l.b16 %v46
  %v117 = vunpack.c.l.b16 %v47
  %v118 = vunpack.c.l.b16 %v48
  %v119 = vunpack.c.l.b16 %v49
  %v120 = vunpack.c.l.b16 %v50
  %v121 = vunpack.c.l.b16 %v51
  %v122 = vunpack.c.l.b16 %v52
  %v123 = vunpack.c.l.b16 %v53
  %v124 = vunpack.c.l.b16 %v54
  %v125 = vunpack.c.l.b16 %v55
  %v126 = vunpack.c.l.b16 %v56
  %v127 = vunpack.c.l.b16 %v57
  %v128 = vunpack.c.l.b16 %v58
  %v129 = vunpack.c.l.b16 %v59
  %v130 = vunpack.c.l.b16 %v60
  %v131 = vunpack.c.l.b16 %v61
  %v132 = vunpack.c.l.b16 %v62
  %v133 = vunpack.c.l.b16 %v63
  %v134 = vunpack.c.l.b16 %v64
  %v135 = vunpack.c.l.b16 %v65
  %v136 = vunpack.c.l.b16 %v66
  %v137 = vunpack.c.l.b16 %v67
  %v138 = vunpack.c.l.b16 %v68
  %v139 = vunpack.c.l.b16 %v69
  %v140 = vunpack.c.l.b16 %v70
  %v141 = vunpack.c.l.b16 %v71
  %v142 = vunpack.c.l.b16 %v72
  %v143 = vunpack.c.l.b16 %v73
  %v144 = vunpack.c.l.b16 %v74
  %v145 = vunpack.c.l.b16 %v75
  %v146 = vpack.c.b16 %v115, %v114
  %v147 = vpack.c.b16 %v117, %v116
  %v148 = vpack.c.b16 %v119, %v118
  %v149 = vpack.c.b16 %v121, %v120
  %v150 = vpack.c.b16 %v123, %v122
  %v151 = vpack.c.b16 %v125, %v124
  %v152 = vpack.c.b16 %v127, %v126
  %v153 = vpack.c.b16 %v129, %v128
  %v154 = vpack.c.b16 %v131, %v130
  %v155 = vpack.c.b16 %v133, %v132
  %v156 = vpack.c.b16 %v135, %v134
  %v157 = vpack.c.b16 %v137, %v136
  %v158 = vpack.c.b16 %v139, %v138
  %v159 = vpack.c.b16 %v141, %v140
  %v160 = vpack.c.b16 %v143, %v142
  %v161 = vpack.c.b16 %v145, %v144
  %178 = vmatprep.subr.bf16.mxu0 0
  %179 = vmatpush1.bf16.xpose.msra.mxu0 %v146
  %180 = vmatprep.subr.bf16.mxu0 0
  %181 = vmatpush1.bf16.xpose.msra.mxu0 %v147
  %182 = vmatprep.subr.bf16.mxu0 0
  %183 = vmatpush1.bf16.xpose.msra.mxu0 %v148
  %184 = vmatprep.subr.bf16.mxu0 0
  %185 = vmatpush1.bf16.xpose.msra.mxu0 %v149
  %186 = vmatprep.subr.bf16.mxu0 0
  %187 = vmatpush1.bf16.xpose.msra.mxu0 %v150
  %188 = vmatprep.subr.bf16.mxu0 0
  %189 = vmatpush1.bf16.xpose.msra.mxu0 %v151
  %190 = vmatprep.subr.bf16.mxu0 0
  %191 = vmatpush1.bf16.xpose.msra.mxu0 %v152
  %192 = vmatprep.subr.bf16.mxu0 0
  %193 = vmatpush1.bf16.xpose.msra.mxu0 %v153
  %194 = vmatprep.subr.bf16.mxu0 0
  %195 = vmatpush1.bf16.xpose.msra.mxu0 %v154
  %196 = vmatprep.subr.bf16.mxu0 0
  %197 = vmatpush1.bf16.xpose.msra.mxu0 %v155
  %198 = vmatprep.subr.bf16.mxu0 0
  %199 = vmatpush1.bf16.xpose.msra.mxu0 %v156
  %200 = vmatprep.subr.bf16.mxu0 0
  %201 = vmatpush1.bf16.xpose.msra.mxu0 %v157
  %202 = vmatprep.subr.bf16.mxu0 0
  %203 = vmatpush1.bf16.xpose.msra.mxu0 %v158
  %204 = vmatprep.subr.bf16.mxu0 0
  %205 = vmatpush1.bf16.xpose.msra.mxu0 %v159
  %206 = vmatprep.subr.bf16.mxu0 0
  %207 = vmatpush1.bf16.xpose.msra.mxu0 %v160
  %208 = vmatprep.subr.bf16.mxu0 0
  %209 = vmatpush1.bf16.xpose.msra.mxu0 %v161
  %210 = vmatprep.mubr.bf16.mxu0 0
  %211 = vmatmul.mubr.bf16.gmra.mrb[0].mxu0 %v80
  %v212 = vpop.f32.mrb[0].mxu0
  %v213 = vadd.f32 0.0, %v212
  %v214 = vpop.f32.mrb[0].mxu0
  %v215 = vadd.f32 0.0, %v214
  %v216 = vpop.f32.mrb[0].mxu0
  %v217 = vadd.f32 0.0, %v216
  %v218 = vpop.f32.mrb[0].mxu0
  %v219 = vadd.f32 0.0, %v218
  %220 = vdwg.mxu0
  %v221 = vadd.f32 %v38, %v213
  %v222 = vadd.f32 %v39, %v215
  %v223 = vadd.f32 %v40, %v217
  %v224 = vadd.f32 %v41, %v219
  %225 = vst [vmem:[%s6] sm:$0xff] %v221
  %226 = vst [vmem:[%s6 + $0x8] sm:$0xff] %v222
  %227 = vst [vmem:[%s6 + $0x10] sm:$0xff] %v223
  %228 = vst [vmem:[%s6 + $0x18] sm:$0xff] %v224
  %v229 = vld [vmem:[%s7] sm:$0xff]
  %v230 = vld [vmem:[%s7 + $0x8] sm:$0xff]
  %v231 = vld [vmem:[%s7 + $0x10] sm:$0xff]
  %v232 = vld [vmem:[%s7 + $0x18] sm:$0xff]
  %v233 = vld [vmem:[%s3] sm:$0xf]
  %v234 = vld [vmem:[%s3 + $0x4] sm:$0xf]
  %v235 = vld [vmem:[%s4] sm:$0xf]
  %v236 = vld [vmem:[%s4 + $0x4] sm:$0xf]
  %v237 = vld [vmem:[%s4 + $0x8] sm:$0xf]
  %v238 = vld [vmem:[%s4 + $0xc] sm:$0xf]
  %v239 = vld [vmem:[%s4 + $0x10] sm:$0xf]
  %v240 = vld [vmem:[%s4 + $0x14] sm:$0xf]
  %v241 = vld [vmem:[%s4 + $0x18] sm:$0xf]
  %v242 = vld [vmem:[%s4 + $0x1c] sm:$0xf]
  %v243 = vld [vmem:[%s4 + $0x20] sm:$0xf]
  %v244 = vld [vmem:[%s4 + $0x24] sm:$0xf]
  %v245 = vld [vmem:[%s4 + $0x28] sm:$0xf]
  %v246 = vld [vmem:[%s4 + $0x2c] sm:$0xf]
  %v247 = vld [vmem:[%s4 + $0x30] sm:$0xf]
  %v248 = vld [vmem:[%s4 + $0x34] sm:$0xf]
  %v249 = vld [vmem:[%s4 + $0x38] sm:$0xf]
  %v250 = vld [vmem:[%s4 + $0x3c] sm:$0xf]
  %v251 = vld [vmem:[%s4 + $0x40] sm:$0xf]
  %v252 = vld [vmem:[%s4 + $0x44] sm:$0xf]
  %v253 = vld [vmem:[%s4 + $0x48] sm:$0xf]
  %v254 = vld [vmem:[%s4 + $0x4c] sm:$0xf]
  %v255 = vld [vmem:[%s4 + $0x50] sm:$0xf]
  %v256 = vld [vmem:[%s4 + $0x54] sm:$0xf]
  %v257 = vld [vmem:[%s4 + $0x58] sm:$0xf]
  %v258 = vld [vmem:[%s4 + $0x5c] sm:$0xf]
  %v259 = vld [vmem:[%s4 + $0x60] sm:$0xf]
  %v260 = vld [vmem:[%s4 + $0x64] sm:$0xf]
  %v261 = vld [vmem:[%s4 + $0x68] sm:$0xf]
  %v262 = vld [vmem:[%s4 + $0x6c] sm:$0xf]
  %v263 = vld [vmem:[%s4 + $0x70] sm:$0xf]
  %v264 = vld [vmem:[%s4 + $0x74] sm:$0xf]
  %v265 = vld [vmem:[%s4 + $0x78] sm:$0xf]
  %v266 = vld [vmem:[%s4 + $0x7c] sm:$0xf]
  %v269 = vunpack.c.l.b16 %v233
  %v270 = vunpack.c.l.b16 %v234
  %v271 = vpack.c.b16 %v270, %v269
  %v305 = vunpack.c.l.b16 %v235
  %v306 = vunpack.c.l.b16 %v236
  %v307 = vunpack.c.l.b16 %v237
  %v308 = vunpack.c.l.b16 %v238
  %v309 = vunpack.c.l.b16 %v239
  %v310 = vunpack.c.l.b16 %v240
  %v311 = vunpack.c.l.b16 %v241
  %v312 = vunpack.c.l.b16 %v242
  %v313 = vunpack.c.l.b16 %v243
  %v314 = vunpack.c.l.b16 %v244
  %v315 = vunpack.c.l.b16 %v245
  %v316 = vunpack.c.l.b16 %v246
  %v317 = vunpack.c.l.b16 %v247
  %v318 = vunpack.c.l.b16 %v248
  %v319 = vunpack.c.l.b16 %v249
  %v320 = vunpack.c.l.b16 %v250
  %v321 = vunpack.c.l.b16 %v251
  %v322 = vunpack.c.l.b16 %v252
  %v323 = vunpack.c.l.b16 %v253
  %v324 = vunpack.c.l.b16 %v254
  %v325 = vunpack.c.l.b16 %v255
  %v326 = vunpack.c.l.b16 %v256
  %v327 = vunpack.c.l.b16 %v257
  %v328 = vunpack.c.l.b16 %v258
  %v329 = vunpack.c.l.b16 %v259
  %v330 = vunpack.c.l.b16 %v260
  %v331 = vunpack.c.l.b16 %v261
  %v332 = vunpack.c.l.b16 %v262
  %v333 = vunpack.c.l.b16 %v263
  %v334 = vunpack.c.l.b16 %v264
  %v335 = vunpack.c.l.b16 %v265
  %v336 = vunpack.c.l.b16 %v266
  %v337 = vpack.c.b16 %v306, %v305
  %v338 = vpack.c.b16 %v308, %v307
  %v339 = vpack.c.b16 %v310, %v309
  %v340 = vpack.c.b16 %v312, %v311
  %v341 = vpack.c.b16 %v314, %v313
  %v342 = vpack.c.b16 %v316, %v315
  %v343 = vpack.c.b16 %v318, %v317
  %v344 = vpack.c.b16 %v320, %v319
  %v345 = vpack.c.b16 %v322, %v321
  %v346 = vpack.c.b16 %v324, %v323
  %v347 = vpack.c.b16 %v326, %v325
  %v348 = vpack.c.b16 %v328, %v327
  %v349 = vpack.c.b16 %v330, %v329
  %v350 = vpack.c.b16 %v332, %v331
  %v351 = vpack.c.b16 %v334, %v333
  %v352 = vpack.c.b16 %v336, %v335
  %369 = vmatprep.subr.bf16.mxu0 0
  %370 = vmatpush1.bf16.xpose.msra.mxu0 %v337
  %371 = vmatprep.subr.bf16.mxu0 0
  %372 = vmatpush1.bf16.xpose.msra.mxu0 %v338
  %373 = vmatprep.subr.bf16.mxu0 0
  %374 = vmatpush1.bf16.xpose.msra.mxu0 %v339
  %375 = vmatprep.subr.bf16.mxu0 0
  %376 = vmatpush1.bf16.xpose.msra.mxu0 %v340
  %377 = vmatprep.subr.bf16.mxu0 0
  %378 = vmatpush1.bf16.xpose.msra.mxu0 %v341
  %379 = vmatprep.subr.bf16.mxu0 0
  %380 = vmatpush1.bf16.xpose.msra.mxu0 %v342
  %381 = vmatprep.subr.bf16.mxu0 0
  %382 = vmatpush1.bf16.xpose.msra.mxu0 %v343
  %383 = vmatprep.subr.bf16.mxu0 0
  %384 = vmatpush1.bf16.xpose.msra.mxu0 %v344
  %385 = vmatprep.subr.bf16.mxu0 0
  %386 = vmatpush1.bf16.xpose.msra.mxu0 %v345
  %387 = vmatprep.subr.bf16.mxu0 0
  %388 = vmatpush1.bf16.xpose.msra.mxu0 %v346
  %389 = vmatprep.subr.bf16.mxu0 0
  %390 = vmatpush1.bf16.xpose.msra.mxu0 %v347
  %391 = vmatprep.subr.bf16.mxu0 0
  %392 = vmatpush1.bf16.xpose.msra.mxu0 %v348
  %393 = vmatprep.subr.bf16.mxu0 0
  %394 = vmatpush1.bf16.xpose.msra.mxu0 %v349
  %395 = vmatprep.subr.bf16.mxu0 0
  %396 = vmatpush1.bf16.xpose.msra.mxu0 %v350
  %397 = vmatprep.subr.bf16.mxu0 0
  %398 = vmatpush1.bf16.xpose.msra.mxu0 %v351
  %399 = vmatprep.subr.bf16.mxu0 0
  %400 = vmatpush1.bf16.xpose.msra.mxu0 %v352
  %401 = vmatprep.mubr.bf16.mxu0 0
  %402 = vmatmul.mubr.bf16.gmra.mrb[0].mxu0 %v271
  %v403 = vpop.f32.mrb[0].mxu0
  %v404 = vadd.f32 0.0, %v403
  %v405 = vpop.f32.mrb[0].mxu0
  %v406 = vadd.f32 0.0, %v405
  %v407 = vpop.f32.mrb[0].mxu0
  %v408 = vadd.f32 0.0, %v407
  %v409 = vpop.f32.mrb[0].mxu0
  %v410 = vadd.f32 0.0, %v409
  %411 = vdwg.mxu0
  %v412 = vadd.f32 %v229, %v404
  %v413 = vadd.f32 %v230, %v406
  %v414 = vadd.f32 %v231, %v408
  %v415 = vadd.f32 %v232, %v410
  %416 = vst [vmem:[%s7] sm:$0xff] %v412
  %417 = vst [vmem:[%s7 + $0x8] sm:$0xff] %v413
  %418 = vst [vmem:[%s7 + $0x10] sm:$0xff] %v414
  %419 = vst [vmem:[%s7 + $0x18] sm:$0xff] %v415
  // Predicated region
  $region30: #{label_embedding_compress_forward.3} parent=0 // pred_check
    %p420 = pneg %p26
  $region31: #{label_embedding_compress_forward.3} parent=0 // pred_check_branch
    %422 = sbr.rel (%p420) target = $region33
  $region32: #{label_embedding_compress_forward.3} parent=0 // pred_region
    %v423 = vld [vmem:[%s6] sm:$0xff]
    %v424 = vld [vmem:[%s6 + $0x8] sm:$0xff]
    %v425 = vld [vmem:[%s6 + $0x10] sm:$0xff]
    %v426 = vld [vmem:[%s6 + $0x18] sm:$0xff]
    %v427 = vld [vmem:[%s2] sm:$0x3]
    %v429 = vlaneseq
    %v430 = vshrl.u32 %v429, 7
    %v431 = vsub.s32 0, %v430
    %v432 = vrot.slane %v427, %v431
    %v433 = vlaneseq
    %v434 = vshrl.u32 %v433, 7
    %v435 = vsub.s32 1, %v434
    %v436 = vrot.slane %v427, %v435
    %v439 = vadd.f32 %v423, %v432
    %v440 = vadd.f32 %v424, %v436
    %v441 = vadd.f32 %v425, %v432
    %v442 = vadd.f32 %v426, %v436
    %443 = vst [vmem:[%s6] sm:$0xff] %v439
    %444 = vst [vmem:[%s6 + $0x8] sm:$0xff] %v440
    %445 = vst [vmem:[%s6 + $0x10] sm:$0xff] %v441
    %446 = vst [vmem:[%s6 + $0x18] sm:$0xff] %v442
    %v447 = vld [vmem:[%s7] sm:$0xff]
    %v448 = vld [vmem:[%s7 + $0x8] sm:$0xff]
    %v449 = vld [vmem:[%s7 + $0x10] sm:$0xff]
    %v450 = vld [vmem:[%s7 + $0x18] sm:$0xff]
    %v451 = vld [vmem:[%s5] sm:$0x3]
    %v453 = vlaneseq
    %v454 = vshrl.u32 %v453, 7
    %v455 = vsub.s32 0, %v454
    %v456 = vrot.slane %v451, %v455
    %v457 = vlaneseq
    %v458 = vshrl.u32 %v457, 7
    %v459 = vsub.s32 1, %v458
    %v460 = vrot.slane %v451, %v459
    %v463 = vadd.f32 %v447, %v456
    %v464 = vadd.f32 %v448, %v460
    %v465 = vadd.f32 %v449, %v456
    %v466 = vadd.f32 %v450, %v460
    %v467 = vmax.f32 %v463, 0.0
    %v468 = vmax.f32 %v464, 0.0
    %v469 = vmax.f32 %v465, 0.0
    %v470 = vmax.f32 %v466, 0.0
    %471 = vst [vmem:[%s7] sm:$0xff] %v467
    %472 = vst [vmem:[%s7 + $0x8] sm:$0xff] %v468
    %473 = vst [vmem:[%s7 + $0x10] sm:$0xff] %v469
    %474 = vst [vmem:[%s7 + $0x18] sm:$0xff] %v470
  $region33: #{label_embedding_compress_forward.3} parent=0 // pred_fallthru
    _
  // Predicated region
  $region34: #{label_embedding_compress_forward.3} parent=0 // pred_check
    _
  $region35: #{label_embedding_compress_forward.3} parent=0 // pred_check_branch
    %476 = sbr.rel (0) target = $region37
  $region36: #{label_embedding_compress_forward.3} parent=0 // pred_region
    _
  $region37: #{label_embedding_compress_forward.3} parent=0 // pred_fallthru
    _
  // Predicated region
  $region38: #{label_embedding_compress_forward.3} parent=0 // pred_check
    _
  $region39: #{label_embedding_compress_forward.3} parent=0 // pred_check_branch
    %478 = sbr.rel (0) target = $region41
  $region40: #{label_embedding_compress_forward.3} parent=0 // pred_region
    _
  $region41: #{label_embedding_compress_forward.3} parent=0 // pred_fallthru
    _
  // Predicated region
  $region42: #{label_embedding_compress_forward.3} parent=0 // pred_check
    _
  $region43: #{label_embedding_compress_forward.3} parent=0 // pred_check_branch
    %480 = sbr.rel (0) target = $region45
  $region44: #{label_embedding_compress_forward.3} parent=0 // pred_region
    _
  $region45: #{label_embedding_compress_forward.3} parent=0 // pred_fallthru
    _
  // Predicated region
  $region46: #{label_embedding_compress_forward.3} parent=0 // pred_check
    _
  $region47: #{label_embedding_compress_forward.3} parent=0 // pred_check_branch
    %482 = sbr.rel (0) target = $region49
  $region48: #{label_embedding_compress_forward.3} parent=0 // pred_region
    _
  $region49: #{label_embedding_compress_forward.3} parent=0 // pred_fallthru
    _

</llo_original>
